<compile_context>
chip_gen: v7x
topology: tpu7x:2x2x1
jax: 0.10.0
libtpu: 0.0.40
codegen_flags: <defaults>
</compile_context>

<pallas_src>
import functools

import jax
import jax.numpy as jnp
import numpy as np
from jax.experimental import pallas as pl
from jax.experimental.pallas import tpu as pltpu

_MEAN = 0.1307
_SIGMA = 0.3081
_LANE = 128                         # vreg lane width
_SUBLANE = 8                        # vreg sublane count
_TARGET_BLOCK_BYTES = 4 << 20       # ~4 MiB input per grid step
_SPLIT_THRESHOLD_BYTES = 512 << 10  # force multi-step grid past this (v7x megacore)


def _normalize_kernel(x_ref, o_ref, *, mean, inv_sigma):
    # Load native dtype, standardize in f32 vregs, store in output dtype.
    x = x_ref[...].astype(jnp.float32)
    o_ref[...] = ((x - jnp.float32(mean)) * jnp.float32(inv_sigma)).astype(o_ref.dtype)


def _num_tensorcores() -> int:
    # v7x packs 2 TensorCores per chip; v5e/v6e have 1. Best-effort detection.
    try:
        kind = jax.devices()[0].device_kind.lower()
        if "v7" in kind or "7x" in kind:
            return 2
    except Exception:
        pass
    return 1


def _choose_tile_rows(rows: int, max_itemsize: int, num_tc: int, override) -> int:
    if override is not None:
        tile_r = int(override)
    else:
        tile_r = max(_SUBLANE, _TARGET_BLOCK_BYTES // (_LANE * max_itemsize))
        # Guarantee >= 2 grid steps per TensorCore on multi-core chips so the
        # "parallel" grid axis actually shards the HBM stream.
        if num_tc > 1 and rows * _LANE * max_itemsize > _SPLIT_THRESHOLD_BYTES:
            tile_r = min(tile_r, pl.cdiv(rows, 2 * num_tc))
    tile_r = min(tile_r, rows)
    tile_r = max(_SUBLANE, ((tile_r + _SUBLANE - 1) // _SUBLANE) * _SUBLANE)
    return tile_r


def normalizing_node_forward(x, mean: float = _MEAN, sigma: float = _SIGMA,
                             tile_rows=None) -> jax.Array:
    """JAX/Pallas equivalent of NormalizingNode().forward(x) for any shape."""
    x = jnp.asarray(x)
    orig_shape = x.shape
    in_dtype = x.dtype
    # Match torch promotion: (x - float32 mean) is at least float32.
    out_dtype = jnp.result_type(in_dtype, jnp.float32)

    total = int(x.size)
    if total == 0:
        return jnp.zeros(orig_shape, out_dtype)

    rows = pl.cdiv(total, _LANE)
    lane_pad = rows * _LANE - total

    flat = x.reshape(-1)
    if lane_pad:
        # Only the sub-128-element lane tail is padded.
        flat = jnp.pad(flat, (0, lane_pad))
    x2d = flat.reshape(rows, _LANE)

    in_isz = np.dtype(in_dtype).itemsize
    out_isz = np.dtype(out_dtype).itemsize
    tile_r = _choose_tile_rows(rows, max(in_isz, out_isz), _num_tensorcores(), tile_rows)
    grid = pl.cdiv(rows, tile_r)  # partial last block handled by Pallas

    # 2 buffers per array (double-buffered pipeline) + headroom.
    block_bytes = tile_r * _LANE * (in_isz + out_isz)
    vmem_limit = int(min(2 * block_bytes + (16 << 20), 48 << 20))

    kernel = functools.partial(_normalize_kernel,
                               mean=float(mean), inv_sigma=1.0 / float(sigma))
    y2d = pl.pallas_call(
        kernel,
        out_shape=jax.ShapeDtypeStruct((rows, _LANE), out_dtype),
        grid=(grid,),
        in_specs=[pl.BlockSpec((tile_r, _LANE), lambda i: (i, 0))],
        out_specs=pl.BlockSpec((tile_r, _LANE), lambda i: (i, 0)),
        compiler_params=pltpu.CompilerParams(
            dimension_semantics=("parallel",),
            vmem_limit_bytes=vmem_limit),
    )(x2d)

    out_flat = y2d.reshape(-1)
    if lane_pad:
        out_flat = out_flat[:total]
    return out_flat.reshape(orig_shape)


if __name__ == "__main__":
    key = jax.random.PRNGKey(0)
    k1, k2, k3, k4 = jax.random.split(key, 4)

    # Typical IBP bound planes: (2, C, H, W), lane-aligned total.
    x = jax.random.uniform(k1, (2, 4, 16, 16), dtype=jnp.float32)
    out = jax.block_until_ready(normalizing_node_forward(x))
    ref = (x - _MEAN) / _SIGMA
    assert out.shape == x.shape and out.dtype == jnp.float32
    assert jnp.allclose(out, ref, atol=1e-5, rtol=1e-6), "4-D bounds mismatch"

    # Non-4-D, non-lane-aligned total (exercises the lane-tail pad path).
    x2 = jax.random.uniform(k2, (8, 2), dtype=jnp.float32)
    out2 = jax.block_until_ready(normalizing_node_forward(x2))
    ref2 = (x2 - _MEAN) / _SIGMA
    assert out2.shape == x2.shape
    assert jnp.allclose(out2, ref2, atol=1e-5, rtol=1e-6), "2-D bounds mismatch"

    # Multi-grid-step path with a partial last block (rows=23, tile=8 -> grid=3).
    x3 = jax.random.uniform(k3, (2, 3, 20, 24), dtype=jnp.float32)
    out3 = jax.block_until_ready(normalizing_node_forward(x3, tile_rows=8))
    ref3 = (x3 - _MEAN) / _SIGMA
    assert jnp.allclose(out3, ref3, atol=1e-5, rtol=1e-6), "partial-block path mismatch"

    # bf16 input read natively, standardized in f32 (matches torch promotion).
    x4 = jax.random.uniform(k4, (2, 8, 32, 32), dtype=jnp.bfloat16)
    out4 = jax.block_until_ready(normalizing_node_forward(x4, tile_rows=32))
    ref4 = (x4.astype(jnp.float32) - _MEAN) / _SIGMA
    assert out4.dtype == jnp.float32
    assert jnp.allclose(out4, ref4, atol=1e-4, rtol=1e-5), "bf16 path mismatch"

    print("KERNEL_OK")
</pallas_src>

<mosaic_0001>
module attributes {stable_mosaic.version = 11 : i64} {
  func.func @_normalize_kernel(%arg0: i32, %arg1: memref<16x128xf32, #tpu.memory_space<vmem>>, %arg2: memref<16x128xf32, #tpu.memory_space<vmem>>) attributes {dimension_semantics = [#tpu.dimension_semantics<parallel>], iteration_bounds = array<i64: 1>, scalar_prefetch = 0 : i64, scratch_operands = 0 : i64, tpu.core_type = #tpu.core_type<tc>, window_params = [{transform_indices = @transform_0, window_bounds = array<i64: 16, 128>}, {transform_indices = @transform_1, window_bounds = array<i64: 16, 128>}]} {
    %c0 = arith.constant 0 : index
    %c0_0 = arith.constant 0 : index
    %0 = vector.load %arg1[%c0, %c0_0] : memref<16x128xf32, #tpu.memory_space<vmem>>, vector<16x128xf32>
    %cst = arith.constant 1.307000e-01 : f32
    %1 = vector.broadcast %cst : f32 to vector<16x128xf32>
    %2 = arith.subf %0, %1 : vector<16x128xf32>
    %cst_1 = arith.constant 3.24569941 : f32
    %3 = vector.broadcast %cst_1 : f32 to vector<16x128xf32>
    %4 = arith.mulf %2, %3 : vector<16x128xf32>
    %c0_2 = arith.constant 0 : index
    %c0_3 = arith.constant 0 : index
    %5 = vector.load %arg2[%c0_2, %c0_3] : memref<16x128xf32, #tpu.memory_space<vmem>>, vector<16x128xf32>
    tpu.vector_store %arg2[%c0_2, %c0_3], %4 {strides = array<i32>} : memref<16x128xf32, #tpu.memory_space<vmem>>, vector<16x128xf32>,
    return
  }
  func.func @transform_0(%arg0: i32) -> (i32, i32) {
    %c0_i32 = arith.constant 0 : i32
    %c0_i32_0 = arith.constant 0 : i32
    return %arg0, %c0_i32 : i32, i32
  }
  func.func @transform_1(%arg0: i32) -> (i32, i32) {
    %c0_i32 = arith.constant 0 : i32
    %c0_i32_0 = arith.constant 0 : i32
    return %arg0, %c0_i32 : i32, i32
  }
}

</mosaic_0001>

<llo_original>
// kernel: tpu_custom_call.1
$region0: #{tpu_custom_call.1}
  #allocation0 [shape = 'u32[]', space=smem, size = 0x4, offset = 0x4, fixed_abs, tag = 'smem constant byte address 0x4 - core index']
  #allocation1 [shape = 'u32[144,128]{1,0:T(1,128)}', space=vmem, size = 0x12000, scoped, tag = 'internal scratch']
  %s0 = inlined_call_operand.hbm [shape: f32[16,128], index: 0, kind: input, shape index: {}]
  %s1 = inlined_call_operand.hbm [shape: f32[16,128], index: 1, kind: output, shape index: {}]
  %s2 = sld [smem:[#allocation0]]
  $region18: #{tpu_custom_call.1} parent=0
    _
  %s4 = ssub.s32 1, %s2
  %s5 = scalar_select 0, %s4, %s2
  $region1: #{tpu_custom_call.1} parent=0
    #allocation2 [shape = 'u8[8192]{0}', space=vmem, size = 0x2000, scoped, tag = 'input window, operand 0, single buffered']
    #allocation3 [shape = 's32[1]{0}', space=sflag, size = 0x4, scoped, tag = 'scoped memory for tpu_custom_call.1']
    #allocation4 [shape = 's32[1]{0}', space=sflag, size = 0x4, scoped, tag = 'scoped memory for tpu_custom_call.1']
    #allocation5 [shape = 'u8[8192]{0}', space=vmem, size = 0x2000, scoped, tag = 'output window, operand 0, single buffered']
    %6 = vsyncpa [#allocation3], 0
    %7 = vsyncpa [#allocation4], 0
    // Predicated region
    $region2: #{tpu_custom_call.1} parent=1 // pred_check
      _
    $region3: #{tpu_custom_call.1} parent=1 // pred_check_branch
      %9 = sbr.rel (0) target = $region5
    $region4: #{tpu_custom_call.1} parent=1 // pred_region
      %s11 = ssub.s32 256, 256
      %12 = vsyncadd [#allocation3], %s11
      %s13 = sshll.u32 [#allocation2], 4
      %s14 = int_to_ptr.vmem [resolvable:$true] %s13
      %19 = dma.hbm_to_vmem [thread:$0]  %s0, 256, %s14, [#allocation3], 128, 128, 8
    $region5: #{tpu_custom_call.1} parent=1 // pred_fallthru
      _
    // Predicated region
    $region6: #{tpu_custom_call.1} parent=1 // pred_check
      _
    $region7: #{tpu_custom_call.1} parent=1 // pred_check_branch
      %21 = sbr.rel (0) target = $region9
    $region8: #{tpu_custom_call.1} parent=1 // pred_region
      %22 = dma.done [#allocation3], 256
    $region9: #{tpu_custom_call.1} parent=1 // pred_fallthru
      _
    %v23 = vld [vmem:[#allocation2] sm:$0xff]
    %v24 = vld [vmem:[#allocation2 + $0x8] sm:$0xff]
    %v25 = vsub.f32 %v23, 0.1307
    %v26 = vsub.f32 %v24, 0.1307
    %v27 = vmul.f32 %v25, 3.2456994
    %v28 = vmul.f32 %v26, 3.2456994
    %29 = vst [vmem:[#allocation5] sm:$0xff] %v27
    %30 = vst [vmem:[#allocation5 + $0x8] sm:$0xff] %v28
    // Predicated region
    $region10: #{tpu_custom_call.1} parent=1 // pred_check
      _
    $region11: #{tpu_custom_call.1} parent=1 // pred_check_branch
      %32 = sbr.rel (0) target = $region13
    $region12: #{tpu_custom_call.1} parent=1 // pred_region
      %s34 = ssub.s32 256, 256
      %35 = vsyncadd [#allocation4], %s34
      %s36 = sshll.u32 [#allocation5], 4
      %s37 = int_to_ptr.vmem [resolvable:$true] %s36
      %42 = dma.vmem_to_hbm [thread:$0]  %s37, 256, %s1, [#allocation4], 128, 128, 8
    $region13: #{tpu_custom_call.1} parent=1 // pred_fallthru
      _
    // Predicated region
    $region14: #{tpu_custom_call.1} parent=1 // pred_check
      _
    $region15: #{tpu_custom_call.1} parent=1 // pred_check_branch
      %44 = sbr.rel (0) target = $region17
    $region16: #{tpu_custom_call.1} parent=1 // pred_region
      %45 = dma.done [#allocation4], 256
    $region17: #{tpu_custom_call.1} parent=1 // pred_fallthru
      _
    %46 = vsyncpa [#allocation3], 1
    %47 = vsyncpa [#allocation4], 1

</llo_original>
